<compile_context>
chip_gen: v7x
topology: tpu7x:2x2x1
jax: 0.10.0
libtpu: 0.0.40
codegen_flags: <defaults>
</compile_context>

<pallas_src>
import jax
import jax.numpy as jnp
from jax.experimental import pallas as pl
from jax.experimental.pallas import tpu as pltpu


def _round_up(x, m):
    return ((x + m - 1) // m) * m


def _mask_criterion_kernel(p_ref, t_ref, m_ref, loss_ref):
    j = pl.program_id(1)                       # vocab-tile index (reduction axis)
    tm, tv = p_ref.shape

    p = p_ref[...]                             # (TM, TV), native dtype (f32 or bf16)
    t = t_ref[...]                             # (TM, 1) int32
    m = m_ref[...].astype(jnp.float32)         # (TM, 1)

    # One-hot gather: compare the local lane iota against the tile-local target
    # index (offset hoisted onto the narrow (TM,1) targets instead of the wide
    # iota).  Out-of-tile / padded (-1) targets never match -> exact 0.
    t_local = t - j * tv                       # (TM, 1)
    col = jax.lax.broadcasted_iota(jnp.int32, (tm, tv), 1)
    gathered = jnp.sum(jnp.where(col == t_local, p, 0), axis=-1, keepdims=True)
    gathered = gathered.astype(jnp.float32)    # exact: at most one nonzero per row

    part = jnp.sum(-gathered * m)              # scalar partial loss for this tile

    @pl.when(j == 0)
    def _():
        loss_ref[...] = jnp.zeros_like(loss_ref)

    loss_ref[...] += part


def _choose_tiles(n_rows, vocab, itemsize):
    # Double-buffered predicts block budget (bytes): safe on v7x's 64 MiB VMEM,
    # already >= 85% of HBM roofline per DMA block -> no need for bigger tiles.
    budget = 24 * 1024 * 1024
    tv = min(_round_up(vocab, 128), 8192)           # lane tile (last vocab tile may be partial)
    tm = budget // (2 * tv * itemsize)              # rows fitting double-buffered
    tm = max(8, min(1024, (tm // 8) * 8))           # sublane multiple of 8, capped
    # Keep g_rows >= 2 so the "parallel" row axis feeds both v7x TensorCores.
    tm = min(tm, max(8, _round_up(pl.cdiv(n_rows, 2), 8)))
    return tm, tv


def mask_criterion(predicts, targets, masks):
    """predicts: (B,T,V) log-probs; targets: (B,T) ints; masks: (B,T) floats.

    Notes (matching the PyTorch module's semantics):
      * returns nan/inf if sum(masks) == 0 (same as the reference).
      * out-of-range targets contribute 0 instead of erroring like torch.gather.
    """
    B, T, V = predicts.shape
    N = B * T

    p2 = predicts.reshape(N, V)                     # caller dtype, streamed as-is
    t2 = targets.reshape(N, 1).astype(jnp.int32)
    m2 = masks.reshape(N, 1).astype(jnp.float32)

    tm, tv = _choose_tiles(N, V, p2.dtype.itemsize)
    g_rows = pl.cdiv(N, tm)
    g_cols = pl.cdiv(V, tv)

    # Pad ONLY the tiny (N,1) side arrays to a row-tile multiple.  Targets are
    # padded with -1 (never matches a column) and masks with 0, so tail rows of
    # the (unpadded) predicts boundary block contribute exactly 0.
    n_pad = g_rows * tm
    if n_pad != N:
        t2 = jnp.pad(t2, ((0, n_pad - N), (0, 0)), constant_values=-1)
        m2 = jnp.pad(m2, ((0, n_pad - N), (0, 0)))

    bytes_accessed = (
        N * V * p2.dtype.itemsize           # predicts stream (dominant)
        + n_pad * (4 + 4)                   # targets + masks
        + g_rows * 8 * 128 * 4              # partial-sum output slab
    )
    cost = pl.CostEstimate(
        flops=4 * N * V,                    # cmp + select + reduce-add (+ misc)
        transcendentals=0,
        bytes_accessed=bytes_accessed,
    )

    loss_parts = pl.pallas_call(
        _mask_criterion_kernel,
        out_shape=jax.ShapeDtypeStruct((g_rows, 8, 128), jnp.float32),
        grid_spec=pltpu.PrefetchScalarGridSpec(
            num_scalar_prefetch=0,
            grid=(g_rows, g_cols),                  # reduction (vocab) axis last
            in_specs=[
                pl.BlockSpec((tm, tv), lambda i, j: (i, j)),
                pl.BlockSpec((tm, 1), lambda i, j: (i, 0)),
                pl.BlockSpec((tm, 1), lambda i, j: (i, 0)),
            ],
            out_specs=pl.BlockSpec((1, 8, 128), lambda i, j: (i, 0, 0)),
        ),
        compiler_params=pltpu.CompilerParams(
            # row blocks independent -> megacore-shardable on v7x;
            # vocab axis is the carried per-block accumulation.
            dimension_semantics=("parallel", "arbitrary"),
            vmem_limit_bytes=40 * 1024 * 1024,      # > v5e 16 MiB default, < v7x cap
        ),
        cost_estimate=cost,
    )(p2, t2, m2)

    loss_sum = jnp.sum(loss_parts[:, 0, 0])
    mask_sum = jnp.sum(masks.astype(jnp.float32))   # free in plain XLA
    return loss_sum / mask_sum


def mask_criterion_ref(predicts, targets, masks):
    B, T, V = predicts.shape
    p = predicts.reshape(-1, V)
    t = targets.reshape(-1)
    m = masks.reshape(-1).astype(jnp.float32)
    gathered = jnp.take_along_axis(p, t[:, None].astype(jnp.int32), axis=1)[:, 0]
    return jnp.sum(-gathered.astype(jnp.float32) * m) / jnp.sum(m)


if __name__ == "__main__":
    key = jax.random.PRNGKey(0)
    k1, k2, k3 = jax.random.split(key, 3)

    B, T, V = 2, 8, 32  # small demo shapes; N = 16 rows, vocab 32
    logits = jax.random.normal(k1, (B, T, V), dtype=jnp.float32)
    predicts = jax.nn.log_softmax(logits, axis=-1)
    targets = jax.random.randint(k2, (B, T), 0, V, dtype=jnp.int32)
    masks = (jax.random.uniform(k3, (B, T)) > 0.3).astype(jnp.float32)
    masks = masks.at[0, 0].set(1.0)  # ensure nonzero mask sum

    loss = mask_criterion(predicts, targets, masks)
    jax.block_until_ready(loss)

    ref = mask_criterion_ref(predicts, targets, masks)
    assert jnp.allclose(loss, ref, rtol=1e-5, atol=1e-5), (loss, ref)

    print("KERNEL_OK")
</pallas_src>

<mosaic_0001>
module attributes {stable_mosaic.version = 11 : i64} {
  func.func @_mask_criterion_kernel(%arg0: i32, %arg1: i32, %arg2: memref<8x128xf32, #tpu.memory_space<vmem>>, %arg3: memref<8x1xi32, #tpu.memory_space<vmem>>, %arg4: memref<8x1xf32, #tpu.memory_space<vmem>>, %arg5: memref<1x8x128xf32, #tpu.memory_space<vmem>>) attributes {dimension_semantics = [#tpu.dimension_semantics<parallel>, #tpu.dimension_semantics<arbitrary>], iteration_bounds = array<i64: 2, 1>, scalar_prefetch = 0 : i64, scratch_operands = 0 : i64, tpu.core_type = #tpu.core_type<tc>, window_params = [{transform_indices = @transform_0, window_bounds = array<i64: 8, 128>}, {transform_indices = @transform_1, window_bounds = array<i64: 8, 1>}, {transform_indices = @transform_2, window_bounds = array<i64: 8, 1>}, {transform_indices = @transform_3, window_bounds = array<i64: 1, 8, 128>}]} {
    %c0 = arith.constant 0 : index
    %c0_0 = arith.constant 0 : index
    %0 = vector.load %arg2[%c0, %c0_0] : memref<8x128xf32, #tpu.memory_space<vmem>>, vector<8x128xf32>
    %c0_1 = arith.constant 0 : index
    %c0_2 = arith.constant 0 : index
    %1 = vector.load %arg3[%c0_1, %c0_2] : memref<8x1xi32, #tpu.memory_space<vmem>>, vector<8x1xi32>
    %c0_3 = arith.constant 0 : index
    %c0_4 = arith.constant 0 : index
    %2 = vector.load %arg4[%c0_3, %c0_4] : memref<8x1xf32, #tpu.memory_space<vmem>>, vector<8x1xf32>
    %c128_i32 = arith.constant 128 : i32
    %3 = arith.muli %arg1, %c128_i32 : i32
    %4 = vector.broadcast %3 : i32 to vector<8x1xi32>
    %5 = arith.subi %1, %4 : vector<8x1xi32>
    %6 = tpu.iota {dimensions = array<i32: 1>} : vector<8x128xi32>
    %7 = vector.broadcast %5 : vector<8x1xi32> to vector<8x128xi32>
    %8 = arith.cmpi eq, %6, %7 : vector<8x128xi32>
    %c0_i32 = arith.constant 0 : i32
    %9 = arith.sitofp %c0_i32 : i32 to f32
    %10 = vector.broadcast %9 : f32 to vector<8x128xf32>
    %11 = arith.select %8, %0, %10 : vector<8x128xi1>, vector<8x128xf32>
    %cst = arith.constant dense<0.000000e+00> : vector<8xf32>
    %12 = vector.multi_reduction <add>, %11, %cst [1] : vector<8x128xf32> to vector<8xf32>
    %13 = vector.shape_cast %12 : vector<8xf32> to vector<8x1xf32>
    %cst_5 = arith.constant 0.000000e+00 : f32
    %14 = vector.broadcast %cst_5 : f32 to vector<8x1xf32>
    %15 = arith.subf %14, %13 : vector<8x1xf32>
    %16 = arith.mulf %15, %2 : vector<8x1xf32>
    %17 = vector.shape_cast %16 : vector<8x1xf32> to vector<1x8x1xf32>
    %cst_6 = arith.constant dense<0.000000e+00> : vector<1xf32>
    %18 = vector.multi_reduction <add>, %17, %cst_6 [1, 2] : vector<1x8x1xf32> to vector<1xf32>
    %19 = vector.shape_cast %18 : vector<1xf32> to vector<1x1x1xf32>
    %20 = vector.extract %19[0, 0, 0] : f32 from vector<1x1x1xf32>
    %c0_i32_7 = arith.constant 0 : i32
    %21 = arith.cmpi eq, %arg1, %c0_i32_7 : i32
    %22 = arith.extui %21 : i1 to i32
    %c0_i32_8 = arith.constant 0 : i32
    %23 = arith.cmpi ne, %22, %c0_i32_8 : i32
    scf.if %23 {
      %cst_15 = arith.constant 0.000000e+00 : f32
      %28 = vector.broadcast %cst_15 : f32 to vector<1x8x128xf32>
      %c0_16 = arith.constant 0 : index
      %c0_17 = arith.constant 0 : index
      %c0_18 = arith.constant 0 : index
      %29 = vector.load %arg5[%c0_16, %c0_17, %c0_18] : memref<1x8x128xf32, #tpu.memory_space<vmem>>, vector<1x8x128xf32>
      tpu.vector_store %arg5[%c0_16, %c0_17, %c0_18], %28 {strides = array<i32>} : memref<1x8x128xf32, #tpu.memory_space<vmem>>, vector<1x8x128xf32>,
    } else {
    }
    %c0_9 = arith.constant 0 : index
    %c0_10 = arith.constant 0 : index
    %c0_11 = arith.constant 0 : index
    %24 = vector.load %arg5[%c0_9, %c0_10, %c0_11] : memref<1x8x128xf32, #tpu.memory_space<vmem>>, vector<1x8x128xf32>
    %25 = vector.broadcast %20 : f32 to vector<1x8x128xf32>
    %26 = arith.addf %24, %25 : vector<1x8x128xf32>
    %c0_12 = arith.constant 0 : index
    %c0_13 = arith.constant 0 : index
    %c0_14 = arith.constant 0 : index
    %27 = vector.load %arg5[%c0_12, %c0_13, %c0_14] : memref<1x8x128xf32, #tpu.memory_space<vmem>>, vector<1x8x128xf32>
    tpu.vector_store %arg5[%c0_12, %c0_13, %c0_14], %26 {strides = array<i32>} : memref<1x8x128xf32, #tpu.memory_space<vmem>>, vector<1x8x128xf32>,
    return
  }
  func.func @transform_0(%arg0: i32, %arg1: i32) -> (i32, i32) {
    %c0_i32 = arith.constant 0 : i32
    return %arg0, %arg1 : i32, i32
  }
  func.func @transform_1(%arg0: i32, %arg1: i32) -> (i32, i32) {
    %c0_i32 = arith.constant 0 : i32
    %c0_i32_0 = arith.constant 0 : i32
    return %arg0, %c0_i32 : i32, i32
  }
  func.func @transform_2(%arg0: i32, %arg1: i32) -> (i32, i32) {
    %c0_i32 = arith.constant 0 : i32
    %c0_i32_0 = arith.constant 0 : i32
    return %arg0, %c0_i32 : i32, i32
  }
  func.func @transform_3(%arg0: i32, %arg1: i32) -> (i32, i32, i32) {
    %c0_i32 = arith.constant 0 : i32
    %c0_i32_0 = arith.constant 0 : i32
    %c0_i32_1 = arith.constant 0 : i32
    return %arg0, %c0_i32, %c0_i32_0 : i32, i32, i32
  }
}

</mosaic_0001>

<llo_original>
// kernel: tpu_custom_call.1
$region0: #{tpu_custom_call.1}
  #allocation0 [shape = 'u32[]', space=smem, size = 0x4, offset = 0x4, fixed_abs, tag = 'smem constant byte address 0x4 - core index']
  #allocation1 [shape = 'u32[144,128]{1,0:T(1,128)}', space=vmem, size = 0x12000, scoped, tag = 'internal scratch']
  %s0 = inlined_call_operand.vmem [shape: f32[16,32], index: 0, kind: input, shape index: {}]
  %s1 = inlined_call_operand.vmem [shape: s32[16,1], index: 1, kind: input, shape index: {}]
  %s2 = inlined_call_operand.vmem [shape: f32[16,1], index: 2, kind: input, shape index: {}]
  %s3 = inlined_call_operand.hbm [shape: f32[2,8,128], index: 3, kind: output, shape index: {}]
  %s4 = sld [smem:[#allocation0]]
  $region49: #{tpu_custom_call.1} parent=0
    _
  %s6 = ssub.s32 1, %s4
  %s7 = scalar_select 0, %s6, %s4
  $region1: #{tpu_custom_call.1} parent=0
    #allocation2 [shape = 'u8[8192]{0}', space=vmem, size = 0x2000, scoped, tag = 'output window, operand 0']
    #allocation3 [shape = 's32[2]{0}', space=sflag, size = 0x8, scoped, tag = 'scoped memory for tpu_custom_call.1']
    %8 = vsyncpa [#allocation3], 0
    %s9 = scalar_lea.sflag [#allocation3], 1
    %10 = vsyncpa %s9, 0
    loop: start=0, step=1, limit=4
    $region2: #{tpu_custom_call.1} parent=1 // loop_pre_header
      _
    $region3: #{tpu_custom_call.1} parent=1 // loop_header
      %s12 = sphi 0, %s16
      %p13 = scmp.ge.s32.totalorder %s12, 4
      %s19 = sphi 0, %s31
      %s20 = sphi 0, %s27
      %s21 = sphi 0, %s19
      %s22 = sphi 0, %s20
      %s23 = sphi 0, %s21
      %s24 = sphi 0, %s22
      %s36 = sphi 0, %s38
      %s39 = sphi 0, %s36
      %s40 = sphi 0, %s39
      %s56 = sphi 0, %s40
      %s62 = sphi 0, %s64
      %s65 = sphi 0, %s62
      %s66 = sphi 0, %s65
      %s82 = sphi 0, %s66
      %s88 = sphi 0, %s90
      %s91 = sphi 0, %s88
      %s92 = sphi 0, %s91
      %s108 = sphi 0, %s92
      %s114 = sphi 0, %s116
      %s117 = sphi 0, %s114
      %s118 = sphi 0, %s117
      %s134 = sphi 0, %s118
    $region4: #{tpu_custom_call.1} parent=1 // loop_header_branch
      %15 = sbr.rel (%p13) target = $region8
    $region5: #{tpu_custom_call.1} parent=1 // loop_body
      %s17 = ssub.s32 %s12, 1
      %s18 = ssub.s32 %s12, 2
      %s25 = sadd.s32 1, %s20
      %p26 = scmp.ge.s32.totalorder %s25, 1
      %s27 = scalar_select %p26, 0, %s25
      %s28 = sadd.s32 1, %s19
      %s29 = scalar_select %p26, %s28, %s19
      %p30 = scmp.ge.s32.totalorder %s29, 2
      %s31 = scalar_select %p30, 0, %s29
      %s32 = ssub.s32 %s19, %s31
      %s33 = ssub.s32 %s20, %s27
      %s34 = sor.u32 %s32, %s33
      %p35 = scmp.eq.s32.totalorder %s34, 0
      %s37 = sadd.s32 %s36, 1
      %s38 = scalar_select %p35, %s36, %s37
      %p41 = pneg %p35
      %p42 = scmp.eq.s32.totalorder %s12, 1
      %p43 = por %p41, %p42
      %p44 = scmp.ne.s32.totalorder %s36, %s39
      %p45 = scmp.eq.s32.totalorder %s12, 0
      %p46 = por %p44, %p45
      %p47 = scmp.ne.s32.totalorder %s36, %s39
      %p48 = scmp.eq.s32.totalorder %s17, 1
      %p49 = por %p47, %p48
      %p50 = scmp.ne.s32.totalorder %s39, %s40
      %p51 = scmp.eq.s32.totalorder %s17, 0
      %p52 = por %p50, %p51
      %p53 = scmp.ne.s32.totalorder %s39, %s40
      %p54 = scmp.eq.s32.totalorder %s18, 1
      %p55 = por %p53, %p54
      %p57 = scmp.ne.s32.totalorder %s40, %s56
      %p58 = scmp.eq.s32.totalorder %s18, 0
      %p59 = por %p57, %p58
      %s60 = ssub.s32 %s19, %s31
      %p61 = scmp.eq.s32.totalorder %s60, 0
      %s63 = sadd.s32 %s62, 1
      %s64 = scalar_select %p61, %s62, %s63
      %p67 = pneg %p61
      %p68 = scmp.eq.s32.totalorder %s12, 1
      %p69 = por %p67, %p68
      %p70 = scmp.ne.s32.totalorder %s62, %s65
      %p71 = scmp.eq.s32.totalorder %s12, 0
      %p72 = por %p70, %p71
      %p73 = scmp.ne.s32.totalorder %s62, %s65
      %p74 = scmp.eq.s32.totalorder %s17, 1
      %p75 = por %p73, %p74
      %p76 = scmp.ne.s32.totalorder %s65, %s66
      %p77 = scmp.eq.s32.totalorder %s17, 0
      %p78 = por %p76, %p77
      %p79 = scmp.ne.s32.totalorder %s65, %s66
      %p80 = scmp.eq.s32.totalorder %s18, 1
      %p81 = por %p79, %p80
      %p83 = scmp.ne.s32.totalorder %s66, %s82
      %p84 = scmp.eq.s32.totalorder %s18, 0
      %p85 = por %p83, %p84
      %s86 = ssub.s32 %s19, %s31
      %p87 = scmp.eq.s32.totalorder %s86, 0
      %s89 = sadd.s32 %s88, 1
      %s90 = scalar_select %p87, %s88, %s89
      %p93 = pneg %p87
      %p94 = scmp.eq.s32.totalorder %s12, 1
      %p95 = por %p93, %p94
      %p96 = scmp.ne.s32.totalorder %s88, %s91
      %p97 = scmp.eq.s32.totalorder %s12, 0
      %p98 = por %p96, %p97
      %p99 = scmp.ne.s32.totalorder %s88, %s91
      %p100 = scmp.eq.s32.totalorder %s17, 1
      %p101 = por %p99, %p100
      %p102 = scmp.ne.s32.totalorder %s91, %s92
      %p103 = scmp.eq.s32.totalorder %s17, 0
      %p104 = por %p102, %p103
      %p105 = scmp.ne.s32.totalorder %s91, %s92
      %p106 = scmp.eq.s32.totalorder %s18, 1
      %p107 = por %p105, %p106
      %p109 = scmp.ne.s32.totalorder %s92, %s108
      %p110 = scmp.eq.s32.totalorder %s18, 0
      %p111 = por %p109, %p110
      %s112 = ssub.s32 %s19, %s31
      %p113 = scmp.eq.s32.totalorder %s112, 0
      %s115 = sadd.s32 %s114, 1
      %s116 = scalar_select %p113, %s114, %s115
      %p119 = pneg %p113
      %p120 = scmp.eq.s32.totalorder %s12, 1
      %p121 = por %p119, %p120
      %p122 = scmp.ne.s32.totalorder %s114, %s117
      %p123 = scmp.eq.s32.totalorder %s12, 0
      %p124 = por %p122, %p123
      %p125 = scmp.ne.s32.totalorder %s114, %s117
      %p126 = scmp.eq.s32.totalorder %s17, 1
      %p127 = por %p125, %p126
      %p128 = scmp.ne.s32.totalorder %s117, %s118
      %p129 = scmp.eq.s32.totalorder %s17, 0
      %p130 = por %p128, %p129
      %p131 = scmp.ne.s32.totalorder %s117, %s118
      %p132 = scmp.eq.s32.totalorder %s18, 1
      %p133 = por %p131, %p132
      %p135 = scmp.ne.s32.totalorder %s118, %s134
      %p136 = scmp.eq.s32.totalorder %s18, 0
      %p137 = por %p135, %p136
      %p138 = scmp.le.s32.totalorder 1, %s12
      %p139 = scmp.lt.s32.totalorder %s12, 3
      %p140 = pnand %p138, %p139
      %p141 = pneg %p140
      // Predicated region
      $region9: #{tpu_custom_call.1} parent=5 // pred_check
        _
      $region10: #{tpu_custom_call.1} parent=5 // pred_check_branch
        %143 = sbr.rel (%p140) target = $region12
      $region11: #{tpu_custom_call.1} parent=5 // pred_region
        %s144 = ssub.s32 %s12, 1
      $region12: #{tpu_custom_call.1} parent=5 // pred_fallthru
        _
      %p145 = scmp.lt.s32.totalorder %s12, 2
      // Predicated region
      $region13: #{tpu_custom_call.1} parent=5 // pred_check
        %p146 = pneg %p145
      $region14: #{tpu_custom_call.1} parent=5 // pred_check_branch
        %148 = sbr.rel (%p146) target = $region16
      $region15: #{tpu_custom_call.1} parent=5 // pred_region
        // Predicated region
        $region17: #{tpu_custom_call.1} parent=15 // pred_check
          %p149 = pneg %p46
        $region18: #{tpu_custom_call.1} parent=15 // pred_check_branch
          %151 = sbr.rel (%p149) target = $region20
        $region19: #{tpu_custom_call.1} parent=15 // pred_region
          %p152 = scmp.lt.s32.totalorder %s19, 1
          %s153 = scalar_select %p152, %s19, 1
          %p154 = scmp.lt.s32.totalorder %s20, 0
          %s155 = scalar_select %p154, %s20, 0
          %s156 = sadd.s32 %s155, %s153
          %s157 = smul.addr %s156, 8
          %s158 = scalar_lea.vmem %s0, %s157
        $region20: #{tpu_custom_call.1} parent=15 // pred_fallthru
          _
        // Predicated region
        $region21: #{tpu_custom_call.1} parent=15 // pred_check
          %p159 = pneg %p72
        $region22: #{tpu_custom_call.1} parent=15 // pred_check_branch
          %161 = sbr.rel (%p159) target = $region24
        $region23: #{tpu_custom_call.1} parent=15 // pred_region
          %p162 = scmp.lt.s32.totalorder %s19, 1
          %s163 = scalar_select %p162, %s19, 1
          %s164 = smul.addr %s163, 8
          %s165 = scalar_lea.vmem %s1, %s164
        $region24: #{tpu_custom_call.1} parent=15 // pred_fallthru
          _
        // Predicated region
        $region25: #{tpu_custom_call.1} parent=15 // pred_check
          %p166 = pneg %p98
        $region26: #{tpu_custom_call.1} parent=15 // pred_check_branch
          %168 = sbr.rel (%p166) target = $region28
        $region27: #{tpu_custom_call.1} parent=15 // pred_region
          %p169 = scmp.lt.s32.totalorder %s19, 1
          %s170 = scalar_select %p169, %s19, 1
          %s171 = smul.addr %s170, 8
          %s172 = scalar_lea.vmem %s2, %s171
        $region28: #{tpu_custom_call.1} parent=15 // pred_fallthru
          _
      $region16: #{tpu_custom_call.1} parent=5 // pred_fallthru
        _
      %p173 = scmp.le.s32.totalorder 1, %s12
      %p174 = scmp.lt.s32.totalorder %s12, 3
      %p175 = pnand %p173, %p174
      %p176 = pneg %p175
      // Predicated region
      $region29: #{tpu_custom_call.1} parent=5 // pred_check
        _
      $region30: #{tpu_custom_call.1} parent=5 // pred_check_branch
        %178 = sbr.rel (%p175) target = $region32
      $region31: #{tpu_custom_call.1} parent=5 // pred_region
        %s179 = ssub.s32 %s12, 1
        %p180 = scmp.lt.s32.totalorder %s21, 1
        %s181 = scalar_select %p180, %s21, 1
        %p182 = scmp.lt.s32.totalorder %s22, 0
        %s183 = scalar_select %p182, %s22, 0
        %s184 = sadd.s32 %s183, %s181
        %s185 = smul.addr %s184, 8
        %s186 = scalar_lea.vmem %s0, %s185
        %p187 = pneg %p52
        %p188 = pneg %p49
        %p189 = scmp.lt.s32.totalorder %s21, 1
        %s190 = scalar_select %p189, %s21, 1
        %s191 = smul.addr %s190, 8
        %s192 = scalar_lea.vmem %s1, %s191
        %p193 = pneg %p78
        %p194 = pneg %p75
        %p195 = scmp.lt.s32.totalorder %s21, 1
        %s196 = scalar_select %p195, %s21, 1
        %s197 = smul.addr %s196, 8
        %s198 = scalar_lea.vmem %s2, %s197
        %p199 = pneg %p104
        %p200 = pneg %p101
        %p201 = pneg %p130
        %p202 = pneg %p127
        %s203 = sand.u32 %s117, 1
        %s204 = scalar_lea.sflag [#allocation3], %s203
        %s205 = sand.u32 %s117, 1
        %s206 = smul.addr %s205, 8
        %s207 = scalar_lea.vmem [#allocation2], %s206
        %p208 = scmp.lt.s32.totalorder %s21, 1
        %s209 = scalar_select %p208, %s21, 1
        %p210 = scmp.lt.s32.totalorder %s22, 0
        %s211 = scalar_select %p210, %s22, 0
        %s212 = sadd.s32 %s211, %s209
        %s213 = smul.addr %s212, 8
        %s214 = scalar_lea.vmem %s0, %s213
        %p215 = scmp.lt.s32.totalorder %s21, 1
        %s216 = scalar_select %p215, %s21, 1
        %s217 = smul.addr %s216, 8
        %s218 = scalar_lea.vmem %s1, %s217
        %p219 = scmp.lt.s32.totalorder %s21, 1
        %s220 = scalar_select %p219, %s21, 1
        %s221 = smul.addr %s220, 8
        %s222 = scalar_lea.vmem %s2, %s221
        %v223 = vld [vmem:[%s214] sm:$0xff]
        %v224 = vld [vmem:[%s218] sm:$0xff]
        %v225 = vld [vmem:[%s222] sm:$0xff]
        %s226 = smul.u32 %s22, 128
        %v227 = vstv %s226
        %v228 = vsub.s32 %v224, %v227
        %v229 = vlaneseq
        %v230 = vand.u32 %v229, 127
        %231 = vset.pattern.permute.xlu0 0
        %232 = vperm.xlu0 %231, %v228
        %v233 = vpop.permute.xlu0 %232
        %vm234 = vcmp.eq.s32.totalorder %v230, %v233
        %v235 = vsel %vm234, %v223, 0.0
        %236 = vadd.xlane.f32.xlu0 %v235
        %v237 = vpop.xlane.xlu0 %236
        %v238 = vsub.f32 0.0, %v237
        %v239 = vmul.f32 %v238, %v225
        %vm240 = vcmask 7168
        %v241 = vsel %vm240, %v239, 0.0
        %242 = vadd.xlane.f32.xlu0 %v241
        %v243 = vpop.xlane.xlu0 %242
        %v244 = vrot.slane %v243, 4
        %v245 = vadd.f32 %v243, %v244
        %v246 = vrot.slane %v245, 2
        %v247 = vadd.f32 %v245, %v246
        %v248 = vrot.slane %v247, 1
        %v249 = vadd.f32 %v247, %v248
        %s250 = vtos %v249
        %p251 = scmp.eq.s32.totalorder %s22, 0
        // Predicated region
        $region33: #{tpu_custom_call.1} parent=31 // pred_check
          %p252 = pneg %p251
        $region34: #{tpu_custom_call.1} parent=31 // pred_check_branch
          %254 = sbr.rel (%p252) target = $region36
        $region35: #{tpu_custom_call.1} parent=31 // pred_region
          %255 = vst [vmem:[%s207] sm:$0xff] 0.0
        $region36: #{tpu_custom_call.1} parent=31 // pred_fallthru
          _
        %v256 = vld [vmem:[%s207] sm:$0xff]
        %v257 = vstv %s250
        %v258 = vadd.f32 %v256, %v257
        %259 = vst [vmem:[%s207] sm:$0xff] %v258
        %s260 = sand.u32 %s117, 1
        %s261 = scalar_lea.sflag [#allocation3], %s260
        %s262 = sand.u32 %s117, 1
        %s263 = smul.addr %s262, 8
        %s264 = scalar_lea.vmem [#allocation2], %s263
        // Predicated region
        $region37: #{tpu_custom_call.1} parent=31 // pred_check
          %p265 = pneg %p127
        $region38: #{tpu_custom_call.1} parent=31 // pred_check_branch
          %267 = sbr.rel (%p265) target = $region40
        $region39: #{tpu_custom_call.1} parent=31 // pred_region
          %s269 = ssub.s32 128, 128
          %270 = vsyncadd %s261, %s269
          %s271 = smul.addr %s21, 128
          %s272 = scalar_lea.hbm %s3, %s271
          %s274 = sshll.u32 %s264, 4
          %s275 = int_to_ptr.vmem [resolvable:$true] %s274
          %277 = dma.vmem_to_hbm [thread:$0]  %s275, 128, %s272, %s261
        $region40: #{tpu_custom_call.1} parent=31 // pred_fallthru
          _
      $region32: #{tpu_custom_call.1} parent=5 // pred_fallthru
        _
      %p278 = scmp.le.s32.totalorder 2, %s12
      // Predicated region
      $region41: #{tpu_custom_call.1} parent=5 // pred_check
        %p279 = pneg %p278
      $region42: #{tpu_custom_call.1} parent=5 // pred_check_branch
        %281 = sbr.rel (%p279) target = $region44
      $region43: #{tpu_custom_call.1} parent=5 // pred_region
        %s282 = ssub.s32 %s12, 2
        // Predicated region
        $region45: #{tpu_custom_call.1} parent=43 // pred_check
          %p283 = pneg %p133
        $region46: #{tpu_custom_call.1} parent=43 // pred_check_branch
          %285 = sbr.rel (%p283) target = $region48
        $region47: #{tpu_custom_call.1} parent=43 // pred_region
          %s286 = sand.u32 %s118, 1
          %s287 = scalar_lea.sflag [#allocation3], %s286
          %s288 = sand.u32 %s118, 1
          %s289 = smul.addr %s288, 8
          %s290 = scalar_lea.vmem [#allocation2], %s289
          %291 = dma.done %s287, 128
        $region48: #{tpu_custom_call.1} parent=43 // pred_fallthru
          _
      $region44: #{tpu_custom_call.1} parent=5 // pred_fallthru
        _
    $region6: #{tpu_custom_call.1} parent=1 // loop_footer
      %s16 = sadd.s32 1, %s12
    $region7: #{tpu_custom_call.1} parent=1 // loop_footer_branch
      %11 = sbr.rel target = $region3
    $region8: #{tpu_custom_call.1} parent=1 // loop_exit
      _
    %292 = vsyncpa [#allocation3], 1
    %s293 = scalar_lea.sflag [#allocation3], 1
    %294 = vsyncpa %s293, 1

</llo_original>
